<compile_context>
chip_gen: v6e
topology: v6e:2x2x1
jax: 0.10.0
libtpu: 0.0.40
codegen_flags: <defaults>
</compile_context>

<pallas_src>
import functools

import jax
import jax.numpy as jnp
from jax.experimental import pallas as pl
from jax.experimental.pallas import tpu as pltpu

NH_PAD = 512     # hidden width padded to a multiple of 128 lanes
NOUT_PAD = 128   # output feature dim padded to one full lane group


def _mlp_kernel(t_ref, w1_ref, b1_ref, w2_ref, b2_ref, w3_ref, b3_ref, y_ref):
    """One time-batch MLP forward: (B,1) -> (B,512) -> (B,512) -> (B,128)."""
    t = t_ref[...]                                                   # (B, 1)
    # Layer 1: K=1 matmul is degenerate on the MXU; do it as a VPU broadcast
    # outer product instead:  (B,1) * (1,nh) -> (B,nh).
    h = jnp.tanh(t * w1_ref[...] + b1_ref[...])                      # (B, 512)
    # Layer 2: dense 512x512 on the MXU, f32 accumulation.
    h = jnp.dot(h, w2_ref[...], preferred_element_type=jnp.float32)
    h = jnp.tanh(h + b2_ref[...])                                    # (B, 512)
    # Layer 3: lane-dense padded output (B, 128); unmasked store.
    y = jnp.dot(h, w3_ref[...], preferred_element_type=jnp.float32)
    y_ref[...] = (y + b3_ref[...]).astype(y_ref.dtype)               # (B, 128)


def mlp_forward_pallas(t_steps, padded_params, dim):
    """Run the ode_model MLP on a stack of time batches.

    t_steps: (num_steps, B, 1) float32
    returns: (num_steps, B, dim) float32
    """
    w1, b1, w2, b2, w3, b3 = padded_params
    S, B, _ = t_steps.shape
    nout_pad = w3.shape[1]

    # Weights: constant index_map => loaded into VMEM once, resident across grid.
    def wspec(arr):
        return pl.BlockSpec(arr.shape, lambda s: (0,) * arr.ndim)

    y_pad = pl.pallas_call(
        _mlp_kernel,
        out_shape=jax.ShapeDtypeStruct((S, B, nout_pad), jnp.float32),
        grid=(S,),
        in_specs=[
            # per-step time tile: leading step dim squeezed away in the kernel
            pl.BlockSpec((None, B, 1), lambda s: (s, 0, 0)),
            wspec(w1), wspec(b1),
            wspec(w2), wspec(b2),
            wspec(w3), wspec(b3),
        ],
        out_specs=pl.BlockSpec((None, B, nout_pad), lambda s: (s, 0, 0)),
        compiler_params=pltpu.CompilerParams(
            dimension_semantics=("parallel",)),   # megacore sharding on v7x
    )(t_steps, w1, b1, w2, b2, w3, b3)
    return y_pad[:, :, :dim]


def init_mlp_params(key, nin=1, nh=500, nout=2):
    """Deterministic synthetic init (shapes match MLP(nh=500, nin=1, nout=dim))."""
    ks = jax.random.split(key, 6)

    def lin(kw, kb, fan_in, fan_out):
        bound = 1.0 / jnp.sqrt(jnp.float32(fan_in))
        w = jax.random.uniform(kw, (fan_in, fan_out), jnp.float32, -bound, bound)
        b = jax.random.uniform(kb, (1, fan_out), jnp.float32, -bound, bound)
        return w, b

    w1, b1 = lin(ks[0], ks[1], nin, nh)
    w2, b2 = lin(ks[2], ks[3], nh, nh)
    w3, b3 = lin(ks[4], ks[5], nh, nout)
    return (w1, b1, w2, b2, w3, b3)


def pad_params(params, nh_pad=NH_PAD, nout_pad=NOUT_PAD):
    """Zero-pad weights/biases so all kernel tiles are (8,128)-aligned.

    Zero padding keeps the math exact: padded hidden lanes compute tanh(0)=0
    and padded w2/w3 rows are zero, so nothing leaks into the real outputs.
    """
    w1, b1, w2, b2, w3, b3 = params
    nh = w2.shape[0]
    nout = w3.shape[1]
    dh = nh_pad - nh
    do = nout_pad - nout
    w1p = jnp.pad(w1, ((0, 0), (0, dh)))
    b1p = jnp.pad(b1, ((0, 0), (0, dh)))
    w2p = jnp.pad(w2, ((0, dh), (0, dh)))
    b2p = jnp.pad(b2, ((0, 0), (0, dh)))
    w3p = jnp.pad(w3, ((0, dh), (0, do)))
    b3p = jnp.pad(b3, ((0, 0), (0, do)))
    return (w1p, b1p, w2p, b2p, w3p, b3p)


@functools.partial(jax.jit, static_argnames=("batchsize", "dim"))
def ode_identifier_forward_steps(rng, padded_params, t_starts, Ts, batchsize, dim):
    """Batched-over-steps Pallas equivalent of ODE_Identifier.forward.

    t_starts: (num_steps,) float32   Ts: (num_steps,) float32
    returns y: (num_steps, batchsize, dim)
    """
    S = t_starts.shape[0]
    # Glue (plain JAX): random sample times, sort, prepend t_start, add feature dim.
    r = jax.random.uniform(rng, (S, batchsize - 1), jnp.float32)
    t_rand = jnp.sort(t_starts[:, None] + r * Ts[:, None], axis=-1)
    t = jnp.concatenate([t_starts[:, None], t_rand], axis=-1)[..., None]  # (S,B,1)
    # Hot path (Pallas kernel): the 3-layer MLP with VMEM-resident weights.
    return mlp_forward_pallas(t, padded_params, dim)


@functools.partial(jax.jit, static_argnames=("batchsize", "dim"))
def ode_identifier_forward(rng, padded_params, t_start, T, batchsize, dim):
    """Single-call Pallas equivalent of the original forward(t_start, T).

    t_start: (1,) float32   T: scalar float32
    returns y: (batchsize, dim)
    """
    r = jax.random.uniform(rng, (batchsize - 1,), jnp.float32)
    t_rand = jnp.sort(t_start[0] + r * T)
    t = jnp.concatenate([t_start, t_rand], axis=0)[:, None]   # (B, 1)
    return mlp_forward_pallas(t[None], padded_params, dim)[0]


def _reference_forward_steps(rng, params, t_starts, Ts, batchsize):
    """Pure-JAX f32 reference for correctness checking (unpadded weights)."""
    w1, b1, w2, b2, w3, b3 = params
    S = t_starts.shape[0]
    r = jax.random.uniform(rng, (S, batchsize - 1), jnp.float32)
    t_rand = jnp.sort(t_starts[:, None] + r * Ts[:, None], axis=-1)
    t = jnp.concatenate([t_starts[:, None], t_rand], axis=-1)[..., None]  # (S,B,1)
    h = jnp.tanh(t @ w1 + b1)
    h = jnp.tanh(h @ w2 + b2)
    return h @ w3 + b3


if __name__ == "__main__":
    # Small shapes consistent with the module: Linear2D task -> dim = 2,
    # batchsize = 8, hidden width nh = 500 (padded to 512 inside the wrapper),
    # and 4 time batches per pallas_call to amortize launch / weight DMA.
    batchsize = 8
    dim = 2
    nh = 500
    num_steps = 4

    key = jax.random.PRNGKey(0)
    k_param, k_time = jax.random.split(key)
    params = init_mlp_params(k_param, nin=1, nh=nh, nout=dim)
    padded_params = pad_params(params)

    t_starts = jnp.array([0.0, 0.5, 1.0, 1.5], dtype=jnp.float32)   # (num_steps,)
    Ts = jnp.array([2.0, 1.5, 1.0, 0.5], dtype=jnp.float32)         # (num_steps,)

    # Multi-step (weight-resident) path.
    y = ode_identifier_forward_steps(k_time, padded_params, t_starts, Ts,
                                     batchsize, dim)
    y = jax.block_until_ready(y)
    y_ref = _reference_forward_steps(k_time, params, t_starts, Ts, batchsize)
    assert y.shape == (num_steps, batchsize, dim)
    assert jnp.allclose(y, y_ref, atol=1e-4, rtol=1e-4)

    # Single-call path (exact original forward signature).
    t0 = jnp.array([0.0], dtype=jnp.float32)
    y1 = ode_identifier_forward(k_time, padded_params, t0, jnp.float32(2.0),
                                batchsize, dim)
    y1 = jax.block_until_ready(y1)
    y1_ref = _reference_forward_steps(
        k_time, params, jnp.array([0.0], jnp.float32),
        jnp.array([2.0], jnp.float32), batchsize)[0]
    assert y1.shape == (batchsize, dim)
    assert jnp.allclose(y1, y1_ref, atol=1e-4, rtol=1e-4)

    print("KERNEL_OK")
</pallas_src>

<mosaic_0001>
module attributes {stable_mosaic.version = 11 : i64} {
  func.func @_mlp_kernel(%arg0: i32, %arg1: memref<1x8x1xf32, #tpu.memory_space<vmem>>, %arg2: memref<1x512xf32, #tpu.memory_space<vmem>>, %arg3: memref<1x512xf32, #tpu.memory_space<vmem>>, %arg4: memref<512x512xf32, #tpu.memory_space<vmem>>, %arg5: memref<1x512xf32, #tpu.memory_space<vmem>>, %arg6: memref<512x128xf32, #tpu.memory_space<vmem>>, %arg7: memref<1x128xf32, #tpu.memory_space<vmem>>, %arg8: memref<1x8x128xf32, #tpu.memory_space<vmem>>) attributes {dimension_semantics = [#tpu.dimension_semantics<parallel>], iteration_bounds = array<i64: 4>, scalar_prefetch = 0 : i64, scratch_operands = 0 : i64, tpu.core_type = #tpu.core_type<tc>, window_params = [{transform_indices = @transform_0, window_bounds = array<i64: 1, 8, 1>}, {pipeline_mode = #tpu.pipeline_mode<synchronous>, transform_indices = @transform_1, window_bounds = array<i64: 1, 512>}, {pipeline_mode = #tpu.pipeline_mode<synchronous>, transform_indices = @transform_2, window_bounds = array<i64: 1, 512>}, {pipeline_mode = #tpu.pipeline_mode<synchronous>, transform_indices = @transform_3, window_bounds = array<i64: 512, 512>}, {pipeline_mode = #tpu.pipeline_mode<synchronous>, transform_indices = @transform_4, window_bounds = array<i64: 1, 512>}, {pipeline_mode = #tpu.pipeline_mode<synchronous>, transform_indices = @transform_5, window_bounds = array<i64: 512, 128>}, {pipeline_mode = #tpu.pipeline_mode<synchronous>, transform_indices = @transform_6, window_bounds = array<i64: 1, 128>}, {transform_indices = @transform_7, window_bounds = array<i64: 1, 8, 128>}]} {
    %c0 = arith.constant 0 : index
    %c0_0 = arith.constant 0 : index
    %c0_1 = arith.constant 0 : index
    %0 = vector.load %arg1[%c0, %c0_0, %c0_1] : memref<1x8x1xf32, #tpu.memory_space<vmem>>, vector<1x8x1xf32>
    %1 = vector.shape_cast %0 : vector<1x8x1xf32> to vector<8x1xf32>
    %c0_2 = arith.constant 0 : index
    %c0_3 = arith.constant 0 : index
    %2 = vector.load %arg2[%c0_2, %c0_3] : memref<1x512xf32, #tpu.memory_space<vmem>>, vector<1x512xf32>
    %3 = vector.broadcast %1 : vector<8x1xf32> to vector<8x512xf32>
    %4 = vector.broadcast %2 : vector<1x512xf32> to vector<8x512xf32>
    %5 = arith.mulf %3, %4 : vector<8x512xf32>
    %c0_4 = arith.constant 0 : index
    %c0_5 = arith.constant 0 : index
    %6 = vector.load %arg3[%c0_4, %c0_5] : memref<1x512xf32, #tpu.memory_space<vmem>>, vector<1x512xf32>
    %7 = vector.broadcast %6 : vector<1x512xf32> to vector<8x512xf32>
    %8 = arith.addf %5, %7 : vector<8x512xf32>
    %9 = math.tanh %8 : vector<8x512xf32>
    %c0_6 = arith.constant 0 : index
    %c0_7 = arith.constant 0 : index
    %10 = vector.load %arg4[%c0_6, %c0_7] : memref<512x512xf32, #tpu.memory_space<vmem>>, vector<512x512xf32>
    %cst = arith.constant dense<0.000000e+00> : vector<8x512xf32>
    %11 = tpu.matmul %9, %10, %cst {dimension_numbers = #tpu.dot_dimension_numbers<[1], [0], [0], [1], [0, 0, 1, 1], [], []>} : vector<8x512xf32>, vector<512x512xf32>, vector<8x512xf32> -> vector<8x512xf32>
    %c0_8 = arith.constant 0 : index
    %c0_9 = arith.constant 0 : index
    %12 = vector.load %arg5[%c0_8, %c0_9] : memref<1x512xf32, #tpu.memory_space<vmem>>, vector<1x512xf32>
    %13 = vector.broadcast %12 : vector<1x512xf32> to vector<8x512xf32>
    %14 = arith.addf %11, %13 : vector<8x512xf32>
    %15 = math.tanh %14 : vector<8x512xf32>
    %c0_10 = arith.constant 0 : index
    %c0_11 = arith.constant 0 : index
    %16 = vector.load %arg6[%c0_10, %c0_11] : memref<512x128xf32, #tpu.memory_space<vmem>>, vector<512x128xf32>
    %cst_12 = arith.constant dense<0.000000e+00> : vector<8x128xf32>
    %17 = tpu.matmul %15, %16, %cst_12 {dimension_numbers = #tpu.dot_dimension_numbers<[1], [0], [0], [1], [0, 0, 1, 1], [], []>} : vector<8x512xf32>, vector<512x128xf32>, vector<8x128xf32> -> vector<8x128xf32>
    %c0_13 = arith.constant 0 : index
    %c0_14 = arith.constant 0 : index
    %18 = vector.load %arg7[%c0_13, %c0_14] : memref<1x128xf32, #tpu.memory_space<vmem>>, vector<1x128xf32>
    %19 = vector.broadcast %18 : vector<1x128xf32> to vector<8x128xf32>
    %20 = arith.addf %17, %19 : vector<8x128xf32>
    %c0_15 = arith.constant 0 : index
    %c0_16 = arith.constant 0 : index
    %c0_17 = arith.constant 0 : index
    %21 = vector.load %arg8[%c0_15, %c0_16, %c0_17] : memref<1x8x128xf32, #tpu.memory_space<vmem>>, vector<1x8x128xf32>
    %22 = vector.shape_cast %21 : vector<1x8x128xf32> to vector<8x128xf32>
    %23 = vector.shape_cast %20 : vector<8x128xf32> to vector<1x8x128xf32>
    tpu.vector_store %arg8[%c0_15, %c0_16, %c0_17], %23 {strides = array<i32>} : memref<1x8x128xf32, #tpu.memory_space<vmem>>, vector<1x8x128xf32>,
    return
  }
  func.func @transform_0(%arg0: i32) -> (i32, i32, i32) {
    %c0_i32 = arith.constant 0 : i32
    %c0_i32_0 = arith.constant 0 : i32
    %c0_i32_1 = arith.constant 0 : i32
    return %arg0, %c0_i32, %c0_i32_0 : i32, i32, i32
  }
  func.func @transform_1(%arg0: i32) -> (i32, i32) {
    %c0_i32 = arith.constant 0 : i32
    %c0_i32_0 = arith.constant 0 : i32
    %c0_i32_1 = arith.constant 0 : i32
    return %c0_i32, %c0_i32_0 : i32, i32
  }
  func.func @transform_2(%arg0: i32) -> (i32, i32) {
    %c0_i32 = arith.constant 0 : i32
    %c0_i32_0 = arith.constant 0 : i32
    %c0_i32_1 = arith.constant 0 : i32
    return %c0_i32, %c0_i32_0 : i32, i32
  }
  func.func @transform_3(%arg0: i32) -> (i32, i32) {
    %c0_i32 = arith.constant 0 : i32
    %c0_i32_0 = arith.constant 0 : i32
    %c0_i32_1 = arith.constant 0 : i32
    return %c0_i32, %c0_i32_0 : i32, i32
  }
  func.func @transform_4(%arg0: i32) -> (i32, i32) {
    %c0_i32 = arith.constant 0 : i32
    %c0_i32_0 = arith.constant 0 : i32
    %c0_i32_1 = arith.constant 0 : i32
    return %c0_i32, %c0_i32_0 : i32, i32
  }
  func.func @transform_5(%arg0: i32) -> (i32, i32) {
    %c0_i32 = arith.constant 0 : i32
    %c0_i32_0 = arith.constant 0 : i32
    %c0_i32_1 = arith.constant 0 : i32
    return %c0_i32, %c0_i32_0 : i32, i32
  }
  func.func @transform_6(%arg0: i32) -> (i32, i32) {
    %c0_i32 = arith.constant 0 : i32
    %c0_i32_0 = arith.constant 0 : i32
    %c0_i32_1 = arith.constant 0 : i32
    return %c0_i32, %c0_i32_0 : i32, i32
  }
  func.func @transform_7(%arg0: i32) -> (i32, i32, i32) {
    %c0_i32 = arith.constant 0 : i32
    %c0_i32_0 = arith.constant 0 : i32
    %c0_i32_1 = arith.constant 0 : i32
    return %arg0, %c0_i32, %c0_i32_0 : i32, i32, i32
  }
}

</mosaic_0001>

<llo_original>
// kernel: ode_identifier_forward_steps.1
$region0: #{ode_identifier_forward_steps.1}
  #allocation0 [shape = 'u32[]', space=smem, size = 0x4, offset = 0x4, fixed_abs, tag = 'smem constant byte address 0x4 - core index']
  #allocation1 [shape = 'u32[144,128]{1,0:T(1,128)}', space=vmem, size = 0x12000, scoped, tag = 'internal scratch']
  %s0 = inlined_call_operand.vmem [shape: f32[4,8,1], index: 0, kind: input, shape index: {}]
  %s1 = inlined_call_operand.vmem [shape: f32[1,512], index: 1, kind: input, shape index: {}]
  %s2 = inlined_call_operand.vmem [shape: f32[1,512], index: 2, kind: input, shape index: {}]
  %s3 = inlined_call_operand.hbm [shape: f32[512,512], index: 3, kind: input, shape index: {}]
  %s4 = inlined_call_operand.vmem [shape: f32[1,512], index: 4, kind: input, shape index: {}]
  %s5 = inlined_call_operand.hbm [shape: f32[512,128], index: 5, kind: input, shape index: {}]
  %s6 = inlined_call_operand.vmem [shape: f32[1,128], index: 6, kind: input, shape index: {}]
  %s7 = inlined_call_operand.vmem [shape: f32[4,8,128], index: 7, kind: output, shape index: {}]
  %s8 = sld [smem:[#allocation0]]
  $region69: #{ode_identifier_forward_steps.1} parent=0
    _
  %s10 = ssub.s32 1, %s8
  %s11 = scalar_select 0, %s10, %s8
  $region1: #{ode_identifier_forward_steps.1} parent=0
    #allocation2 [shape = 'u8[1048576]{0}', space=vmem, size = 0x100000, scoped, tag = 'input window, operand 3, single buffered']
    #allocation3 [shape = 's32[2]{0}', space=sflag, size = 0x8, scoped, tag = 'scoped memory for ode_identifier_forward_steps.1']
    #allocation4 [shape = 'u8[262144]{0}', space=vmem, size = 0x40000, scoped, tag = 'input window, operand 5, single buffered']
    #allocation5 [shape = 's32[1]{0}', space=sflag, size = 0x4, scoped, tag = 'scoped memory for ode_identifier_forward_steps.1']
    %12 = vsyncpa [#allocation3], 0
    %13 = vsyncpa [#allocation5], 0
    loop: start=0, step=1, limit=6
    $region2: #{ode_identifier_forward_steps.1} parent=1 // loop_pre_header
      _
    $region3: #{ode_identifier_forward_steps.1} parent=1 // loop_header
      %s15 = sphi 0, %s19
      %p16 = scmp.ge.s32.totalorder %s15, 6
      %s25 = sphi 0, %s27
      %s28 = sphi 0, %s25
      %s29 = sphi 0, %s28
      %s45 = sphi 0, %s29
      %s49 = sphi 0, %s49
      %s51 = sphi 0, %s49
      %s52 = sphi 0, %s51
      %s66 = sphi 0, %s52
      %s70 = sphi 0, %s70
      %s72 = sphi 0, %s70
      %s73 = sphi 0, %s72
      %s87 = sphi 0, %s73
      %s91 = sphi 0, %s91
      %s93 = sphi 0, %s91
      %s94 = sphi 0, %s93
      %s108 = sphi 0, %s94
      %s112 = sphi 0, %s112
      %s114 = sphi 0, %s112
      %s115 = sphi 0, %s114
      %s129 = sphi 0, %s115
      %s133 = sphi 0, %s133
      %s135 = sphi 0, %s133
      %s136 = sphi 0, %s135
      %s150 = sphi 0, %s136
      %s154 = sphi 0, %s154
      %s156 = sphi 0, %s154
      %s157 = sphi 0, %s156
      %s171 = sphi 0, %s157
      %s177 = sphi 0, %s179
      %s180 = sphi 0, %s177
      %s181 = sphi 0, %s180
      %s197 = sphi 0, %s181
    $region4: #{ode_identifier_forward_steps.1} parent=1 // loop_header_branch
      %18 = sbr.rel (%p16) target = $region8
    $region5: #{ode_identifier_forward_steps.1} parent=1 // loop_body
      %s20 = ssub.s32 %s15, 1
      %s21 = ssub.s32 %s15, 2
      %s22 = sadd.s32 %s15, 1
      %s23 = ssub.s32 %s15, %s22
      %p24 = scmp.eq.s32.totalorder %s23, 0
      %s26 = sadd.s32 %s25, 1
      %s27 = scalar_select %p24, %s25, %s26
      %p30 = pneg %p24
      %p31 = scmp.eq.s32.totalorder %s15, 3
      %p32 = por %p30, %p31
      %p33 = scmp.ne.s32.totalorder %s25, %s28
      %p34 = scmp.eq.s32.totalorder %s15, 0
      %p35 = por %p33, %p34
      %p36 = scmp.ne.s32.totalorder %s25, %s28
      %p37 = scmp.eq.s32.totalorder %s20, 3
      %p38 = por %p36, %p37
      %p39 = scmp.ne.s32.totalorder %s28, %s29
      %p40 = scmp.eq.s32.totalorder %s20, 0
      %p41 = por %p39, %p40
      %p42 = scmp.ne.s32.totalorder %s28, %s29
      %p43 = scmp.eq.s32.totalorder %s21, 3
      %p44 = por %p42, %p43
      %p46 = scmp.ne.s32.totalorder %s29, %s45
      %p47 = scmp.eq.s32.totalorder %s21, 0
      %p48 = por %p46, %p47
      %s50 = sadd.s32 %s49, 1
      %p53 = scmp.eq.s32.totalorder %s15, 3
      %p54 = scmp.ne.s32.totalorder %s49, %s51
      %p55 = scmp.eq.s32.totalorder %s15, 0
      %p56 = por %p54, %p55
      %p57 = scmp.ne.s32.totalorder %s49, %s51
      %p58 = scmp.eq.s32.totalorder %s20, 3
      %p59 = por %p57, %p58
      %p60 = scmp.ne.s32.totalorder %s51, %s52
      %p61 = scmp.eq.s32.totalorder %s20, 0
      %p62 = por %p60, %p61
      %p63 = scmp.ne.s32.totalorder %s51, %s52
      %p64 = scmp.eq.s32.totalorder %s21, 3
      %p65 = por %p63, %p64
      %p67 = scmp.ne.s32.totalorder %s52, %s66
      %p68 = scmp.eq.s32.totalorder %s21, 0
      %p69 = por %p67, %p68
      %s71 = sadd.s32 %s70, 1
      %p74 = scmp.eq.s32.totalorder %s15, 3
      %p75 = scmp.ne.s32.totalorder %s70, %s72
      %p76 = scmp.eq.s32.totalorder %s15, 0
      %p77 = por %p75, %p76
      %p78 = scmp.ne.s32.totalorder %s70, %s72
      %p79 = scmp.eq.s32.totalorder %s20, 3
      %p80 = por %p78, %p79
      %p81 = scmp.ne.s32.totalorder %s72, %s73
      %p82 = scmp.eq.s32.totalorder %s20, 0
      %p83 = por %p81, %p82
      %p84 = scmp.ne.s32.totalorder %s72, %s73
      %p85 = scmp.eq.s32.totalorder %s21, 3
      %p86 = por %p84, %p85
      %p88 = scmp.ne.s32.totalorder %s73, %s87
      %p89 = scmp.eq.s32.totalorder %s21, 0
      %p90 = por %p88, %p89
      %s92 = sadd.s32 %s91, 1
      %p95 = scmp.eq.s32.totalorder %s15, 3
      %p96 = scmp.ne.s32.totalorder %s91, %s93
      %p97 = scmp.eq.s32.totalorder %s15, 0
      %p98 = por %p96, %p97
      %p99 = scmp.ne.s32.totalorder %s91, %s93
      %p100 = scmp.eq.s32.totalorder %s20, 3
      %p101 = por %p99, %p100
      %p102 = scmp.ne.s32.totalorder %s93, %s94
      %p103 = scmp.eq.s32.totalorder %s20, 0
      %p104 = por %p102, %p103
      %p105 = scmp.ne.s32.totalorder %s93, %s94
      %p106 = scmp.eq.s32.totalorder %s21, 3
      %p107 = por %p105, %p106
      %p109 = scmp.ne.s32.totalorder %s94, %s108
      %p110 = scmp.eq.s32.totalorder %s21, 0
      %p111 = por %p109, %p110
      %s113 = sadd.s32 %s112, 1
      %p116 = scmp.eq.s32.totalorder %s15, 3
      %p117 = scmp.ne.s32.totalorder %s112, %s114
      %p118 = scmp.eq.s32.totalorder %s15, 0
      %p119 = por %p117, %p118
      %p120 = scmp.ne.s32.totalorder %s112, %s114
      %p121 = scmp.eq.s32.totalorder %s20, 3
      %p122 = por %p120, %p121
      %p123 = scmp.ne.s32.totalorder %s114, %s115
      %p124 = scmp.eq.s32.totalorder %s20, 0
      %p125 = por %p123, %p124
      %p126 = scmp.ne.s32.totalorder %s114, %s115
      %p127 = scmp.eq.s32.totalorder %s21, 3
      %p128 = por %p126, %p127
      %p130 = scmp.ne.s32.totalorder %s115, %s129
      %p131 = scmp.eq.s32.totalorder %s21, 0
      %p132 = por %p130, %p131
      %s134 = sadd.s32 %s133, 1
      %p137 = scmp.eq.s32.totalorder %s15, 3
      %p138 = scmp.ne.s32.totalorder %s133, %s135
      %p139 = scmp.eq.s32.totalorder %s15, 0
      %p140 = por %p138, %p139
      %p141 = scmp.ne.s32.totalorder %s133, %s135
      %p142 = scmp.eq.s32.totalorder %s20, 3
      %p143 = por %p141, %p142
      %p144 = scmp.ne.s32.totalorder %s135, %s136
      %p145 = scmp.eq.s32.totalorder %s20, 0
      %p146 = por %p144, %p145
      %p147 = scmp.ne.s32.totalorder %s135, %s136
      %p148 = scmp.eq.s32.totalorder %s21, 3
      %p149 = por %p147, %p148
      %p151 = scmp.ne.s32.totalorder %s136, %s150
      %p152 = scmp.eq.s32.totalorder %s21, 0
      %p153 = por %p151, %p152
      %s155 = sadd.s32 %s154, 1
      %p158 = scmp.eq.s32.totalorder %s15, 3
      %p159 = scmp.ne.s32.totalorder %s154, %s156
      %p160 = scmp.eq.s32.totalorder %s15, 0
      %p161 = por %p159, %p160
      %p162 = scmp.ne.s32.totalorder %s154, %s156
      %p163 = scmp.eq.s32.totalorder %s20, 3
      %p164 = por %p162, %p163
      %p165 = scmp.ne.s32.totalorder %s156, %s157
      %p166 = scmp.eq.s32.totalorder %s20, 0
      %p167 = por %p165, %p166
      %p168 = scmp.ne.s32.totalorder %s156, %s157
      %p169 = scmp.eq.s32.totalorder %s21, 3
      %p170 = por %p168, %p169
      %p172 = scmp.ne.s32.totalorder %s157, %s171
      %p173 = scmp.eq.s32.totalorder %s21, 0
      %p174 = por %p172, %p173
      %s175 = ssub.s32 %s15, %s22
      %p176 = scmp.eq.s32.totalorder %s175, 0
      %s178 = sadd.s32 %s177, 1
      %s179 = scalar_select %p176, %s177, %s178
      %p182 = pneg %p176
      %p183 = scmp.eq.s32.totalorder %s15, 3
      %p184 = por %p182, %p183
      %p185 = scmp.ne.s32.totalorder %s177, %s180
      %p186 = scmp.eq.s32.totalorder %s15, 0
      %p187 = por %p185, %p186
      %p188 = scmp.ne.s32.totalorder %s177, %s180
      %p189 = scmp.eq.s32.totalorder %s20, 3
      %p190 = por %p188, %p189
      %p191 = scmp.ne.s32.totalorder %s180, %s181
      %p192 = scmp.eq.s32.totalorder %s20, 0
      %p193 = por %p191, %p192
      %p194 = scmp.ne.s32.totalorder %s180, %s181
      %p195 = scmp.eq.s32.totalorder %s21, 3
      %p196 = por %p194, %p195
      %p198 = scmp.ne.s32.totalorder %s181, %s197
      %p199 = scmp.eq.s32.totalorder %s21, 0
      %p200 = por %p198, %p199
      %p201 = scmp.le.s32.totalorder 1, %s15
      %p202 = scmp.lt.s32.totalorder %s15, 5
      %p203 = pnand %p201, %p202
      %p204 = pneg %p203
      // Predicated region
      $region9: #{ode_identifier_forward_steps.1} parent=5 // pred_check
        _
      $region10: #{ode_identifier_forward_steps.1} parent=5 // pred_check_branch
        %206 = sbr.rel (%p203) target = $region12
      $region11: #{ode_identifier_forward_steps.1} parent=5 // pred_region
        %s207 = ssub.s32 %s15, 1
        // Predicated region
        $region13: #{ode_identifier_forward_steps.1} parent=11 // pred_check
          %p208 = pneg %p62
        $region14: #{ode_identifier_forward_steps.1} parent=11 // pred_check_branch
          %210 = sbr.rel (%p208) target = $region16
        $region15: #{ode_identifier_forward_steps.1} parent=11 // pred_region
          _
        $region16: #{ode_identifier_forward_steps.1} parent=11 // pred_fallthru
          _
        // Predicated region
        $region17: #{ode_identifier_forward_steps.1} parent=11 // pred_check
          %p211 = pneg %p83
        $region18: #{ode_identifier_forward_steps.1} parent=11 // pred_check_branch
          %213 = sbr.rel (%p211) target = $region20
        $region19: #{ode_identifier_forward_steps.1} parent=11 // pred_region
          _
        $region20: #{ode_identifier_forward_steps.1} parent=11 // pred_fallthru
          _
        // Predicated region
        $region21: #{ode_identifier_forward_steps.1} parent=11 // pred_check
          %p214 = pneg %p104
        $region22: #{ode_identifier_forward_steps.1} parent=11 // pred_check_branch
          %216 = sbr.rel (%p214) target = $region24
        $region23: #{ode_identifier_forward_steps.1} parent=11 // pred_region
          %s218 = ssub.s32 32768, 32768
          %219 = vsyncadd [#allocation3], %s218
          %s220 = sshll.u32 [#allocation2], 4
          %s221 = int_to_ptr.vmem [resolvable:$true] %s220
          %226 = dma.hbm_to_vmem [thread:$0]  %s3, 32768, %s221, [#allocation3], 512, 512, 32
        $region24: #{ode_identifier_forward_steps.1} parent=11 // pred_fallthru
          _
        // Predicated region
        $region25: #{ode_identifier_forward_steps.1} parent=11 // pred_check
          %p227 = pneg %p125
        $region26: #{ode_identifier_forward_steps.1} parent=11 // pred_check_branch
          %229 = sbr.rel (%p227) target = $region28
        $region27: #{ode_identifier_forward_steps.1} parent=11 // pred_region
          _
        $region28: #{ode_identifier_forward_steps.1} parent=11 // pred_fallthru
          _
        // Predicated region
        $region29: #{ode_identifier_forward_steps.1} parent=11 // pred_check
          %p230 = pneg %p146
        $region30: #{ode_identifier_forward_steps.1} parent=11 // pred_check_branch
          %232 = sbr.rel (%p230) target = $region32
        $region31: #{ode_identifier_forward_steps.1} parent=11 // pred_region
          %s234 = ssub.s32 8192, 8192
          %235 = vsyncadd [#allocation5], %s234
          %s236 = sshll.u32 [#allocation4], 4
          %s237 = int_to_ptr.vmem [resolvable:$true] %s236
          %242 = dma.hbm_to_vmem [thread:$0]  %s5, 8192, %s237, [#allocation5], 128, 128, 8
        $region32: #{ode_identifier_forward_steps.1} parent=11 // pred_fallthru
          _
        // Predicated region
        $region33: #{ode_identifier_forward_steps.1} parent=11 // pred_check
          %p243 = pneg %p167
        $region34: #{ode_identifier_forward_steps.1} parent=11 // pred_check_branch
          %245 = sbr.rel (%p243) target = $region36
        $region35: #{ode_identifier_forward_steps.1} parent=11 // pred_region
          _
        $region36: #{ode_identifier_forward_steps.1} parent=11 // pred_fallthru
          _
      $region12: #{ode_identifier_forward_steps.1} parent=5 // pred_fallthru
        _
      %p246 = scmp.lt.s32.totalorder %s15, 4
      // Predicated region
      $region37: #{ode_identifier_forward_steps.1} parent=5 // pred_check
        %p247 = pneg %p246
      $region38: #{ode_identifier_forward_steps.1} parent=5 // pred_check_branch
        %249 = sbr.rel (%p247) target = $region40
      $region39: #{ode_identifier_forward_steps.1} parent=5 // pred_region
        // Predicated region
        $region41: #{ode_identifier_forward_steps.1} parent=39 // pred_check
          %p250 = pneg %p35
        $region42: #{ode_identifier_forward_steps.1} parent=39 // pred_check_branch
          %252 = sbr.rel (%p250) target = $region44
        $region43: #{ode_identifier_forward_steps.1} parent=39 // pred_region
          %p253 = scmp.lt.s32.totalorder %s15, 3
          %s254 = scalar_select %p253, %s15, 3
          %s255 = smul.addr %s254, 8
          %s256 = scalar_lea.vmem %s0, %s255
        $region44: #{ode_identifier_forward_steps.1} parent=39 // pred_fallthru
          _
      $region40: #{ode_identifier_forward_steps.1} parent=5 // pred_fallthru
        _
      %p257 = scmp.le.s32.totalorder 1, %s15
      %p258 = scmp.lt.s32.totalorder %s15, 5
      %p259 = pnand %p257, %p258
      %p260 = pneg %p259
      // Predicated region
      $region45: #{ode_identifier_forward_steps.1} parent=5 // pred_check
        _
      $region46: #{ode_identifier_forward_steps.1} parent=5 // pred_check_branch
        %262 = sbr.rel (%p259) target = $region48
      $region47: #{ode_identifier_forward_steps.1} parent=5 // pred_region
        %s263 = ssub.s32 %s15, 1
        // Predicated region
        $region49: #{ode_identifier_forward_steps.1} parent=47 // pred_check
          %p264 = pneg %p104
        $region50: #{ode_identifier_forward_steps.1} parent=47 // pred_check_branch
          %266 = sbr.rel (%p264) target = $region52
        $region51: #{ode_identifier_forward_steps.1} parent=47 // pred_region
          %267 = dma.done [#allocation3], 32768
        $region52: #{ode_identifier_forward_steps.1} parent=47 // pred_fallthru
          _
        // Predicated region
        $region53: #{ode_identifier_forward_steps.1} parent=47 // pred_check
          %p268 = pneg %p146
        $region54: #{ode_identifier_forward_steps.1} parent=47 // pred_check_branch
          %270 = sbr.rel (%p268) target = $region56
        $region55: #{ode_identifier_forward_steps.1} parent=47 // pred_region
          %271 = dma.done [#allocation5], 8192
        $region56: #{ode_identifier_forward_steps.1} parent=47 // pred_fallthru
          _
        %p272 = scmp.lt.s32.totalorder %s20, 3
        %s273 = scalar_select %p272, %s20, 3
        %s274 = smul.addr %s273, 8
        %s275 = scalar_lea.vmem %s0, %s274
        %p276 = pneg %p41
        %p277 = pneg %p38
        %p278 = pneg %p62
        %p279 = pneg %p59
        %p280 = pneg %p83
        %p281 = pneg %p80
        %p282 = pneg %p104
        %p283 = pneg %p101
        %p284 = pneg %p125
        %p285 = pneg %p122
        %p286 = pneg %p146
        %p287 = pneg %p143
        %p288 = pneg %p167
        %p289 = pneg %p164
        %p290 = pneg %p193
        %p291 = pneg %p190
        %p292 = scmp.lt.s32.totalorder %s20, 3
        %s293 = scalar_select %p292, %s20, 3
        %s294 = smul.addr %s293, 8
        %s295 = scalar_lea.vmem %s7, %s294
        %p296 = scmp.lt.s32.totalorder %s20, 3
        %s297 = scalar_select %p296, %s20, 3
        %s298 = smul.addr %s297, 8
        %s299 = scalar_lea.vmem %s0, %s298
        %p300 = scmp.lt.s32.totalorder %s20, 3
        %s301 = scalar_select %p300, %s20, 3
        %s302 = smul.addr %s301, 8
        %s303 = scalar_lea.vmem %s7, %s302
        %v304 = vld [vmem:[%s299] sm:$0xff]
        %v305 = vld [vmem:[%s1] sm:$0xf]
        %307 = vset.pattern.permute.xlu0 0
        %308 = vperm.xlu0 %307, %v304
        %v309 = vpop.permute.xlu0 %308
        %v312 = vlaneseq
        %v313 = vshrl.u32 %v312, 7
        %v314 = vsub.s32 0, %v313
        %v315 = vrot.slane %v305, %v314
        %v316 = vlaneseq
        %v317 = vshrl.u32 %v316, 7
        %v318 = vsub.s32 1, %v317
        %v319 = vrot.slane %v305, %v318
        %v320 = vlaneseq
        %v321 = vshrl.u32 %v320, 7
        %v322 = vsub.s32 2, %v321
        %v323 = vrot.slane %v305, %v322
        %v324 = vlaneseq
        %v325 = vshrl.u32 %v324, 7
        %v326 = vsub.s32 3, %v325
        %v327 = vrot.slane %v305, %v326
        %v332 = vmul.f32 %v309, %v315
        %v333 = vmul.f32 %v309, %v319
        %v334 = vmul.f32 %v309, %v323
        %v335 = vmul.f32 %v309, %v327
        %v336 = vld [vmem:[%s2] sm:$0xf]
        %v338 = vlaneseq
        %v339 = vshrl.u32 %v338, 7
        %v340 = vsub.s32 0, %v339
        %v341 = vrot.slane %v336, %v340
        %v342 = vlaneseq
        %v343 = vshrl.u32 %v342, 7
        %v344 = vsub.s32 1, %v343
        %v345 = vrot.slane %v336, %v344
        %v346 = vlaneseq
        %v347 = vshrl.u32 %v346, 7
        %v348 = vsub.s32 2, %v347
        %v349 = vrot.slane %v336, %v348
        %v350 = vlaneseq
        %v351 = vshrl.u32 %v350, 7
        %v352 = vsub.s32 3, %v351
        %v353 = vrot.slane %v336, %v352
        %v358 = vadd.f32 %v332, %v341
        %v359 = vadd.f32 %v333, %v345
        %v360 = vadd.f32 %v334, %v349
        %v361 = vadd.f32 %v335, %v353
        %v362 = vtanh.pop %v358
        %v363 = vtanh.pop %v359
        %v364 = vtanh.pop %v360
        %v365 = vtanh.pop %v361
        %v366 = vld [vmem:[#allocation2] sm:$0xff]
        %v367 = vld [vmem:[#allocation2 + $0x8] sm:$0xff]
        %v368 = vld [vmem:[#allocation2 + $0x10] sm:$0xff]
        %v369 = vld [vmem:[#allocation2 + $0x18] sm:$0xff]
        %v370 = vld [vmem:[#allocation2 + $0x20] sm:$0xff]
        %v371 = vld [vmem:[#allocation2 + $0x28] sm:$0xff]
        %v372 = vld [vmem:[#allocation2 + $0x30] sm:$0xff]
        %v373 = vld [vmem:[#allocation2 + $0x38] sm:$0xff]
        %v374 = vld [vmem:[#allocation2 + $0x40] sm:$0xff]
        %v375 = vld [vmem:[#allocation2 + $0x48] sm:$0xff]
        %v376 = vld [vmem:[#allocation2 + $0x50] sm:$0xff]
        %v377 = vld [vmem:[#allocation2 + $0x58] sm:$0xff]
        %v378 = vld [vmem:[#allocation2 + $0x60] sm:$0xff]
        %v379 = vld [vmem:[#allocation2 + $0x68] sm:$0xff]
        %v380 = vld [vmem:[#allocation2 + $0x70] sm:$0xff]
        %v381 = vld [vmem:[#allocation2 + $0x78] sm:$0xff]
        %v382 = vld [vmem:[#allocation2 + $0x80] sm:$0xff]
        %v383 = vld [vmem:[#allocation2 + $0x88] sm:$0xff]
        %v384 = vld [vmem:[#allocation2 + $0x90] sm:$0xff]
        %v385 = vld [vmem:[#allocation2 + $0x98] sm:$0xff]
        %v386 = vld [vmem:[#allocation2 + $0xa0] sm:$0xff]
        %v387 = vld [vmem:[#allocation2 + $0xa8] sm:$0xff]
        %v388 = vld [vmem:[#allocation2 + $0xb0] sm:$0xff]
        %v389 = vld [vmem:[#allocation2 + $0xb8] sm:$0xff]
        %v390 = vld [vmem:[#allocation2 + $0xc0] sm:$0xff]
        %v391 = vld [vmem:[#allocation2 + $0xc8] sm:$0xff]
        %v392 = vld [vmem:[#allocation2 + $0xd0] sm:$0xff]
        %v393 = vld [vmem:[#allocation2 + $0xd8] sm:$0xff]
        %v394 = vld [vmem:[#allocation2 + $0xe0] sm:$0xff]
        %v395 = vld [vmem:[#allocation2 + $0xe8] sm:$0xff]
        %v396 = vld [vmem:[#allocation2 + $0xf0] sm:$0xff]
        %v397 = vld [vmem:[#allocation2 + $0xf8] sm:$0xff]
        %v398 = vld [vmem:[#allocation2 + $0x100] sm:$0xff]
        %v399 = vld [vmem:[#allocation2 + $0x108] sm:$0xff]
        %v400 = vld [vmem:[#allocation2 + $0x110] sm:$0xff]
        %v401 = vld [vmem:[#allocation2 + $0x118] sm:$0xff]
        %v402 = vld [vmem:[#allocation2 + $0x120] sm:$0xff]
        %v403 = vld [vmem:[#allocation2 + $0x128] sm:$0xff]
        %v404 = vld [vmem:[#allocation2 + $0x130] sm:$0xff]
        %v405 = vld [vmem:[#allocation2 + $0x138] sm:$0xff]
        %v406 = vld [vmem:[#allocation2 + $0x140] sm:$0xff]
        %v407 = vld [vmem:[#allocation2 + $0x148] sm:$0xff]
        %v408 = vld [vmem:[#allocation2 + $0x150] sm:$0xff]
        %v409 = vld [vmem:[#allocation2 + $0x158] sm:$0xff]
        %v410 = vld [vmem:[#allocation2 + $0x160] sm:$0xff]
        %v411 = vld [vmem:[#allocation2 + $0x168] sm:$0xff]
        %v412 = vld [vmem:[#allocation2 + $0x170] sm:$0xff]
        %v413 = vld [vmem:[#allocation2 + $0x178] sm:$0xff]
        %v414 = vld [vmem:[#allocation2 + $0x180] sm:$0xff]
        %v415 = vld [vmem:[#allocation2 + $0x188] sm:$0xff]
        %v416 = vld [vmem:[#allocation2 + $0x190] sm:$0xff]
        %v417 = vld [vmem:[#allocation2 + $0x198] sm:$0xff]
        %v418 = vld [vmem:[#allocation2 + $0x1a0] sm:$0xff]
        %v419 = vld [vmem:[#allocation2 + $0x1a8] sm:$0xff]
        %v420 = vld [vmem:[#allocation2 + $0x1b0] sm:$0xff]
        %v421 = vld [vmem:[#allocation2 + $0x1b8] sm:$0xff]
        %v422 = vld [vmem:[#allocation2 + $0x1c0] sm:$0xff]
        %v423 = vld [vmem:[#allocation2 + $0x1c8] sm:$0xff]
        %v424 = vld [vmem:[#allocation2 + $0x1d0] sm:$0xff]
        %v425 = vld [vmem:[#allocation2 + $0x1d8] sm:$0xff]
        %v426 = vld [vmem:[#allocation2 + $0x1e0] sm:$0xff]
        %v427 = vld [vmem:[#allocation2 + $0x1e8] sm:$0xff]
        %v428 = vld [vmem:[#allocation2 + $0x1f0] sm:$0xff]
        %v429 = vld [vmem:[#allocation2 + $0x1f8] sm:$0xff]
        %v430 = vld [vmem:[#allocation2 + $0x200] sm:$0xff]
        %v431 = vld [vmem:[#allocation2 + $0x208] sm:$0xff]
        %v432 = vld [vmem:[#allocation2 + $0x210] sm:$0xff]
        %v433 = vld [vmem:[#allocation2 + $0x218] sm:$0xff]
        %v434 = vld [vmem:[#allocation2 + $0x220] sm:$0xff]
        %v435 = vld [vmem:[#allocation2 + $0x228] sm:$0xff]
        %v436 = vld [vmem:[#allocation2 + $0x230] sm:$0xff]
        %v437 = vld [vmem:[#allocation2 + $0x238] sm:$0xff]
        %v438 = vld [vmem:[#allocation2 + $0x240] sm:$0xff]
        %v439 = vld [vmem:[#allocation2 + $0x248] sm:$0xff]
        %v440 = vld [vmem:[#allocation2 + $0x250] sm:$0xff]
        %v441 = vld [vmem:[#allocation2 + $0x258] sm:$0xff]
        %v442 = vld [vmem:[#allocation2 + $0x260] sm:$0xff]
        %v443 = vld [vmem:[#allocation2 + $0x268] sm:$0xff]
        %v444 = vld [vmem:[#allocation2 + $0x270] sm:$0xff]
        %v445 = vld [vmem:[#allocation2 + $0x278] sm:$0xff]
        %v446 = vld [vmem:[#allocation2 + $0x280] sm:$0xff]
        %v447 = vld [vmem:[#allocation2 + $0x288] sm:$0xff]
        %v448 = vld [vmem:[#allocation2 + $0x290] sm:$0xff]
        %v449 = vld [vmem:[#allocation2 + $0x298] sm:$0xff]
        %v450 = vld [vmem:[#allocation2 + $0x2a0] sm:$0xff]
        %v451 = vld [vmem:[#allocation2 + $0x2a8] sm:$0xff]
        %v452 = vld [vmem:[#allocation2 + $0x2b0] sm:$0xff]
        %v453 = vld [vmem:[#allocation2 + $0x2b8] sm:$0xff]
        %v454 = vld [vmem:[#allocation2 + $0x2c0] sm:$0xff]
        %v455 = vld [vmem:[#allocation2 + $0x2c8] sm:$0xff]
        %v456 = vld [vmem:[#allocation2 + $0x2d0] sm:$0xff]
        %v457 = vld [vmem:[#allocation2 + $0x2d8] sm:$0xff]
        %v458 = vld [vmem:[#allocation2 + $0x2e0] sm:$0xff]
        %v459 = vld [vmem:[#allocation2 + $0x2e8] sm:$0xff]
        %v460 = vld [vmem:[#allocation2 + $0x2f0] sm:$0xff]
        %v461 = vld [vmem:[#allocation2 + $0x2f8] sm:$0xff]
        %v462 = vld [vmem:[#allocation2 + $0x300] sm:$0xff]
        %v463 = vld [vmem:[#allocation2 + $0x308] sm:$0xff]
        %v464 = vld [vmem:[#allocation2 + $0x310] sm:$0xff]
        %v465 = vld [vmem:[#allocation2 + $0x318] sm:$0xff]
        %v466 = vld [vmem:[#allocation2 + $0x320] sm:$0xff]
        %v467 = vld [vmem:[#allocation2 + $0x328] sm:$0xff]
        %v468 = vld [vmem:[#allocation2 + $0x330] sm:$0xff]
        %v469 = vld [vmem:[#allocation2 + $0x338] sm:$0xff]
        %v470 = vld [vmem:[#allocation2 + $0x340] sm:$0xff]
        %v471 = vld [vmem:[#allocation2 + $0x348] sm:$0xff]
        %v472 = vld [vmem:[#allocation2 + $0x350] sm:$0xff]
        %v473 = vld [vmem:[#allocation2 + $0x358] sm:$0xff]
        %v474 = vld [vmem:[#allocation2 + $0x360] sm:$0xff]
        %v475 = vld [vmem:[#allocation2 + $0x368] sm:$0xff]
        %v476 = vld [vmem:[#allocation2 + $0x370] sm:$0xff]
        %v477 = vld [vmem:[#allocation2 + $0x378] sm:$0xff]
        %v478 = vld [vmem:[#allocation2 + $0x380] sm:$0xff]
        %v479 = vld [vmem:[#allocation2 + $0x388] sm:$0xff]
        %v480 = vld [vmem:[#allocation2 + $0x390] sm:$0xff]
        %v481 = vld [vmem:[#allocation2 + $0x398] sm:$0xff]
        %v482 = vld [vmem:[#allocation2 + $0x3a0] sm:$0xff]
        %v483 = vld [vmem:[#allocation2 + $0x3a8] sm:$0xff]
        %v484 = vld [vmem:[#allocation2 + $0x3b0] sm:$0xff]
        %v485 = vld [vmem:[#allocation2 + $0x3b8] sm:$0xff]
        %v486 = vld [vmem:[#allocation2 + $0x3c0] sm:$0xff]
        %v487 = vld [vmem:[#allocation2 + $0x3c8] sm:$0xff]
        %v488 = vld [vmem:[#allocation2 + $0x3d0] sm:$0xff]
        %v489 = vld [vmem:[#allocation2 + $0x3d8] sm:$0xff]
        %v490 = vld [vmem:[#allocation2 + $0x3e0] sm:$0xff]
        %v491 = vld [vmem:[#allocation2 + $0x3e8] sm:$0xff]
        %v492 = vld [vmem:[#allocation2 + $0x3f0] sm:$0xff]
        %v493 = vld [vmem:[#allocation2 + $0x3f8] sm:$0xff]
        %v494 = vld [vmem:[#allocation2 + $0x400] sm:$0xff]
        %v495 = vld [vmem:[#allocation2 + $0x408] sm:$0xff]
        %v496 = vld [vmem:[#allocation2 + $0x410] sm:$0xff]
        %v497 = vld [vmem:[#allocation2 + $0x418] sm:$0xff]
        %v498 = vld [vmem:[#allocation2 + $0x420] sm:$0xff]
        %v499 = vld [vmem:[#allocation2 + $0x428] sm:$0xff]
        %v500 = vld [vmem:[#allocation2 + $0x430] sm:$0xff]
        %v501 = vld [vmem:[#allocation2 + $0x438] sm:$0xff]
        %v502 = vld [vmem:[#allocation2 + $0x440] sm:$0xff]
        %v503 = vld [vmem:[#allocation2 + $0x448] sm:$0xff]
        %v504 = vld [vmem:[#allocation2 + $0x450] sm:$0xff]
        %v505 = vld [vmem:[#allocation2 + $0x458] sm:$0xff]
        %v506 = vld [vmem:[#allocation2 + $0x460] sm:$0xff]
        %v507 = vld [vmem:[#allocation2 + $0x468] sm:$0xff]
        %v508 = vld [vmem:[#allocation2 + $0x470] sm:$0xff]
        %v509 = vld [vmem:[#allocation2 + $0x478] sm:$0xff]
        %v510 = vld [vmem:[#allocation2 + $0x480] sm:$0xff]
        %v511 = vld [vmem:[#allocation2 + $0x488] sm:$0xff]
        %v512 = vld [vmem:[#allocation2 + $0x490] sm:$0xff]
        %v513 = vld [vmem:[#allocation2 + $0x498] sm:$0xff]
        %v514 = vld [vmem:[#allocation2 + $0x4a0] sm:$0xff]
        %v515 = vld [vmem:[#allocation2 + $0x4a8] sm:$0xff]
        %v516 = vld [vmem:[#allocation2 + $0x4b0] sm:$0xff]
        %v517 = vld [vmem:[#allocation2 + $0x4b8] sm:$0xff]
        %v518 = vld [vmem:[#allocation2 + $0x4c0] sm:$0xff]
        %v519 = vld [vmem:[#allocation2 + $0x4c8] sm:$0xff]
        %v520 = vld [vmem:[#allocation2 + $0x4d0] sm:$0xff]
        %v521 = vld [vmem:[#allocation2 + $0x4d8] sm:$0xff]
        %v522 = vld [vmem:[#allocation2 + $0x4e0] sm:$0xff]
        %v523 = vld [vmem:[#allocation2 + $0x4e8] sm:$0xff]
        %v524 = vld [vmem:[#allocation2 + $0x4f0] sm:$0xff]
        %v525 = vld [vmem:[#allocation2 + $0x4f8] sm:$0xff]
        %v526 = vld [vmem:[#allocation2 + $0x500] sm:$0xff]
        %v527 = vld [vmem:[#allocation2 + $0x508] sm:$0xff]
        %v528 = vld [vmem:[#allocation2 + $0x510] sm:$0xff]
        %v529 = vld [vmem:[#allocation2 + $0x518] sm:$0xff]
        %v530 = vld [vmem:[#allocation2 + $0x520] sm:$0xff]
        %v531 = vld [vmem:[#allocation2 + $0x528] sm:$0xff]
        %v532 = vld [vmem:[#allocation2 + $0x530] sm:$0xff]
        %v533 = vld [vmem:[#allocation2 + $0x538] sm:$0xff]
        %v534 = vld [vmem:[#allocation2 + $0x540] sm:$0xff]
        %v535 = vld [vmem:[#allocation2 + $0x548] sm:$0xff]
        %v536 = vld [vmem:[#allocation2 + $0x550] sm:$0xff]
        %v537 = vld [vmem:[#allocation2 + $0x558] sm:$0xff]
        %v538 = vld [vmem:[#allocation2 + $0x560] sm:$0xff]
        %v539 = vld [vmem:[#allocation2 + $0x568] sm:$0xff]
        %v540 = vld [vmem:[#allocation2 + $0x570] sm:$0xff]
        %v541 = vld [vmem:[#allocation2 + $0x578] sm:$0xff]
        %v542 = vld [vmem:[#allocation2 + $0x580] sm:$0xff]
        %v543 = vld [vmem:[#allocation2 + $0x588] sm:$0xff]
        %v544 = vld [vmem:[#allocation2 + $0x590] sm:$0xff]
        %v545 = vld [vmem:[#allocation2 + $0x598] sm:$0xff]
        %v546 = vld [vmem:[#allocation2 + $0x5a0] sm:$0xff]
        %v547 = vld [vmem:[#allocation2 + $0x5a8] sm:$0xff]
        %v548 = vld [vmem:[#allocation2 + $0x5b0] sm:$0xff]
        %v549 = vld [vmem:[#allocation2 + $0x5b8] sm:$0xff]
        %v550 = vld [vmem:[#allocation2 + $0x5c0] sm:$0xff]
        %v551 = vld [vmem:[#allocation2 + $0x5c8] sm:$0xff]
        %v552 = vld [vmem:[#allocation2 + $0x5d0] sm:$0xff]
        %v553 = vld [vmem:[#allocation2 + $0x5d8] sm:$0xff]
        %v554 = vld [vmem:[#allocation2 + $0x5e0] sm:$0xff]
        %v555 = vld [vmem:[#allocation2 + $0x5e8] sm:$0xff]
        %v556 = vld [vmem:[#allocation2 + $0x5f0] sm:$0xff]
        %v557 = vld [vmem:[#allocation2 + $0x5f8] sm:$0xff]
        %v558 = vld [vmem:[#allocation2 + $0x600] sm:$0xff]
        %v559 = vld [vmem:[#allocation2 + $0x608] sm:$0xff]
        %v560 = vld [vmem:[#allocation2 + $0x610] sm:$0xff]
        %v561 = vld [vmem:[#allocation2 + $0x618] sm:$0xff]
        %v562 = vld [vmem:[#allocation2 + $0x620] sm:$0xff]
        %v563 = vld [vmem:[#allocation2 + $0x628] sm:$0xff]
        %v564 = vld [vmem:[#allocation2 + $0x630] sm:$0xff]
        %v565 = vld [vmem:[#allocation2 + $0x638] sm:$0xff]
        %v566 = vld [vmem:[#allocation2 + $0x640] sm:$0xff]
        %v567 = vld [vmem:[#allocation2 + $0x648] sm:$0xff]
        %v568 = vld [vmem:[#allocation2 + $0x650] sm:$0xff]
        %v569 = vld [vmem:[#allocation2 + $0x658] sm:$0xff]
        %v570 = vld [vmem:[#allocation2 + $0x660] sm:$0xff]
        %v571 = vld [vmem:[#allocation2 + $0x668] sm:$0xff]
        %v572 = vld [vmem:[#allocation2 + $0x670] sm:$0xff]
        %v573 = vld [vmem:[#allocation2 + $0x678] sm:$0xff]
        %v574 = vld [vmem:[#allocation2 + $0x680] sm:$0xff]
        %v575 = vld [vmem:[#allocation2 + $0x688] sm:$0xff]
        %v576 = vld [vmem:[#allocation2 + $0x690] sm:$0xff]
        %v577 = vld [vmem:[#allocation2 + $0x698] sm:$0xff]
        %v578 = vld [vmem:[#allocation2 + $0x6a0] sm:$0xff]
        %v579 = vld [vmem:[#allocation2 + $0x6a8] sm:$0xff]
        %v580 = vld [vmem:[#allocation2 + $0x6b0] sm:$0xff]
        %v581 = vld [vmem:[#allocation2 + $0x6b8] sm:$0xff]
        %v582 = vld [vmem:[#allocation2 + $0x6c0] sm:$0xff]
        %v583 = vld [vmem:[#allocation2 + $0x6c8] sm:$0xff]
        %v584 = vld [vmem:[#allocation2 + $0x6d0] sm:$0xff]
        %v585 = vld [vmem:[#allocation2 + $0x6d8] sm:$0xff]
        %v586 = vld [vmem:[#allocation2 + $0x6e0] sm:$0xff]
        %v587 = vld [vmem:[#allocation2 + $0x6e8] sm:$0xff]
        %v588 = vld [vmem:[#allocation2 + $0x6f0] sm:$0xff]
        %v589 = vld [vmem:[#allocation2 + $0x6f8] sm:$0xff]
        %v590 = vld [vmem:[#allocation2 + $0x700] sm:$0xff]
        %v591 = vld [vmem:[#allocation2 + $0x708] sm:$0xff]
        %v592 = vld [vmem:[#allocation2 + $0x710] sm:$0xff]
        %v593 = vld [vmem:[#allocation2 + $0x718] sm:$0xff]
        %v594 = vld [vmem:[#allocation2 + $0x720] sm:$0xff]
        %v595 = vld [vmem:[#allocation2 + $0x728] sm:$0xff]
        %v596 = vld [vmem:[#allocation2 + $0x730] sm:$0xff]
        %v597 = vld [vmem:[#allocation2 + $0x738] sm:$0xff]
        %v598 = vld [vmem:[#allocation2 + $0x740] sm:$0xff]
        %v599 = vld [vmem:[#allocation2 + $0x748] sm:$0xff]
        %v600 = vld [vmem:[#allocation2 + $0x750] sm:$0xff]
        %v601 = vld [vmem:[#allocation2 + $0x758] sm:$0xff]
        %v602 = vld [vmem:[#allocation2 + $0x760] sm:$0xff]
        %v603 = vld [vmem:[#allocation2 + $0x768] sm:$0xff]
        %v604 = vld [vmem:[#allocation2 + $0x770] sm:$0xff]
        %v605 = vld [vmem:[#allocation2 + $0x778] sm:$0xff]
        %v606 = vld [vmem:[#allocation2 + $0x780] sm:$0xff]
        %v607 = vld [vmem:[#allocation2 + $0x788] sm:$0xff]
        %v608 = vld [vmem:[#allocation2 + $0x790] sm:$0xff]
        %v609 = vld [vmem:[#allocation2 + $0x798] sm:$0xff]
        %v610 = vld [vmem:[#allocation2 + $0x7a0] sm:$0xff]
        %v611 = vld [vmem:[#allocation2 + $0x7a8] sm:$0xff]
        %v612 = vld [vmem:[#allocation2 + $0x7b0] sm:$0xff]
        %v613 = vld [vmem:[#allocation2 + $0x7b8] sm:$0xff]
        %v614 = vld [vmem:[#allocation2 + $0x7c0] sm:$0xff]
        %v615 = vld [vmem:[#allocation2 + $0x7c8] sm:$0xff]
        %v616 = vld [vmem:[#allocation2 + $0x7d0] sm:$0xff]
        %v617 = vld [vmem:[#allocation2 + $0x7d8] sm:$0xff]
        %v618 = vld [vmem:[#allocation2 + $0x7e0] sm:$0xff]
        %v619 = vld [vmem:[#allocation2 + $0x7e8] sm:$0xff]
        %v620 = vld [vmem:[#allocation2 + $0x7f0] sm:$0xff]
        %v621 = vld [vmem:[#allocation2 + $0x7f8] sm:$0xff]
        %v622 = vld [vmem:[%s4] sm:$0xf]
        %v624 = vlaneseq
        %v625 = vshrl.u32 %v624, 7
        %v626 = vsub.s32 0, %v625
        %v627 = vrot.slane %v622, %v626
        %v628 = vlaneseq
        %v629 = vshrl.u32 %v628, 7
        %v630 = vsub.s32 1, %v629
        %v631 = vrot.slane %v622, %v630
        %v632 = vlaneseq
        %v633 = vshrl.u32 %v632, 7
        %v634 = vsub.s32 2, %v633
        %v635 = vrot.slane %v622, %v634
        %v636 = vlaneseq
        %v637 = vshrl.u32 %v636, 7
        %v638 = vsub.s32 3, %v637
        %v639 = vrot.slane %v622, %v638
        %644 = vmatprep.subr.mxu0 %v427
        %645 = vmatpush1.msra.mxu0 %v426
        %646 = vmatprep.subr.mxu0 %v423
        %647 = vmatpush1.msra.mxu0 %v422
        %648 = vmatprep.subr.mxu0 %v419
        %649 = vmatpush1.msra.mxu0 %v418
        %650 = vmatprep.subr.mxu0 %v415
        %651 = vmatpush1.msra.mxu0 %v414
        %652 = vmatprep.subr.mxu0 %v411
        %653 = vmatpush1.msra.mxu0 %v410
        %654 = vmatprep.subr.mxu0 %v407
        %655 = vmatpush1.msra.mxu0 %v406
        %656 = vmatprep.subr.mxu0 %v403
        %657 = vmatpush1.msra.mxu0 %v402
        %658 = vmatprep.subr.mxu0 %v399
        %659 = vmatpush1.msra.mxu0 %v398
        %660 = vmatprep.subr.mxu0 %v395
        %661 = vmatpush1.msra.mxu0 %v394
        %662 = vmatprep.subr.mxu0 %v391
        %663 = vmatpush1.msra.mxu0 %v390
        %664 = vmatprep.subr.mxu0 %v387
        %665 = vmatpush1.msra.mxu0 %v386
        %666 = vmatprep.subr.mxu0 %v383
        %667 = vmatpush1.msra.mxu0 %v382
        %668 = vmatprep.subr.mxu0 %v379
        %669 = vmatpush1.msra.mxu0 %v378
        %670 = vmatprep.subr.mxu0 %v375
        %671 = vmatpush1.msra.mxu0 %v374
        %672 = vmatprep.subr.mxu0 %v371
        %673 = vmatpush1.msra.mxu0 %v370
        %674 = vmatprep.subr.mxu0 %v367
        %675 = vmatpush1.msra.mxu0 %v366
        %676 = vmatprep.subr.mxu0 %v491
        %677 = vmatpush2.msra.mxu0 %v490
        %678 = vmatprep.subr.mxu0 %v487
        %679 = vmatpush2.msra.mxu0 %v486
        %680 = vmatprep.subr.mxu0 %v483
        %681 = vmatpush2.msra.mxu0 %v482
        %682 = vmatprep.subr.mxu0 %v479
        %683 = vmatpush2.msra.mxu0 %v478
        %684 = vmatprep.subr.mxu0 %v475
        %685 = vmatpush2.msra.mxu0 %v474
        %686 = vmatprep.subr.mxu0 %v471
        %687 = vmatpush2.msra.mxu0 %v470
        %688 = vmatprep.subr.mxu0 %v467
        %689 = vmatpush2.msra.mxu0 %v466
        %690 = vmatprep.subr.mxu0 %v463
        %691 = vmatpush2.msra.mxu0 %v462
        %692 = vmatprep.subr.mxu0 %v459
        %693 = vmatpush2.msra.mxu0 %v458
        %694 = vmatprep.subr.mxu0 %v455
        %695 = vmatpush2.msra.mxu0 %v454
        %696 = vmatprep.subr.mxu0 %v451
        %697 = vmatpush2.msra.mxu0 %v450
        %698 = vmatprep.subr.mxu0 %v447
        %699 = vmatpush2.msra.mxu0 %v446
        %700 = vmatprep.subr.mxu0 %v443
        %701 = vmatpush2.msra.mxu0 %v442
        %702 = vmatprep.subr.mxu0 %v439
        %703 = vmatpush2.msra.mxu0 %v438
        %704 = vmatprep.subr.mxu0 %v435
        %705 = vmatpush2.msra.mxu0 %v434
        %706 = vmatprep.subr.mxu0 %v431
        %707 = vmatpush2.msra.mxu0 %v430
        %708 = vmatprep.mubr.f32.mxu0 %v363
        %709 = vmatmul.mubr.f32.gmra.mxu0 %v362
        %v710 = vpop.f32.mrf.mxu0
        %v711 = vadd.f32 %v627, %v710
        %v712 = vpop.f32.mrf.mxu0
        %v713 = vadd.f32 %v631, %v712
        %714 = vdwg.mxu0
        %715 = vmatprep.subr.mxu0 %v555
        %716 = vmatpush1.msra.mxu0 %v554
        %717 = vmatprep.subr.mxu0 %v551
        %718 = vmatpush1.msra.mxu0 %v550
        %719 = vmatprep.subr.mxu0 %v547
        %720 = vmatpush1.msra.mxu0 %v546
        %721 = vmatprep.subr.mxu0 %v543
        %722 = vmatpush1.msra.mxu0 %v542
        %723 = vmatprep.subr.mxu0 %v539
        %724 = vmatpush1.msra.mxu0 %v538
        %725 = vmatprep.subr.mxu0 %v535
        %726 = vmatpush1.msra.mxu0 %v534
        %727 = vmatprep.subr.mxu0 %v531
        %728 = vmatpush1.msra.mxu0 %v530
        %729 = vmatprep.subr.mxu0 %v527
        %730 = vmatpush1.msra.mxu0 %v526
        %731 = vmatprep.subr.mxu0 %v523
        %732 = vmatpush1.msra.mxu0 %v522
        %733 = vmatprep.subr.mxu0 %v519
        %734 = vmatpush1.msra.mxu0 %v518
        %735 = vmatprep.subr.mxu0 %v515
        %736 = vmatpush1.msra.mxu0 %v514
        %737 = vmatprep.subr.mxu0 %v511
        %738 = vmatpush1.msra.mxu0 %v510
        %739 = vmatprep.subr.mxu0 %v507
        %740 = vmatpush1.msra.mxu0 %v506
        %741 = vmatprep.subr.mxu0 %v503
        %742 = vmatpush1.msra.mxu0 %v502
        %743 = vmatprep.subr.mxu0 %v499
        %744 = vmatpush1.msra.mxu0 %v498
        %745 = vmatprep.subr.mxu0 %v495
        %746 = vmatpush1.msra.mxu0 %v494
        %747 = vmatprep.subr.mxu0 %v619
        %748 = vmatpush2.msra.mxu0 %v618
        %749 = vmatprep.subr.mxu0 %v615
        %750 = vmatpush2.msra.mxu0 %v614
        %751 = vmatprep.subr.mxu0 %v611
        %752 = vmatpush2.msra.mxu0 %v610
        %753 = vmatprep.subr.mxu0 %v607
        %754 = vmatpush2.msra.mxu0 %v606
        %755 = vmatprep.subr.mxu0 %v603
        %756 = vmatpush2.msra.mxu0 %v602
        %757 = vmatprep.subr.mxu0 %v599
        %758 = vmatpush2.msra.mxu0 %v598
        %759 = vmatprep.subr.mxu0 %v595
        %760 = vmatpush2.msra.mxu0 %v594
        %761 = vmatprep.subr.mxu0 %v591
        %762 = vmatpush2.msra.mxu0 %v590
        %763 = vmatprep.subr.mxu0 %v587
        %764 = vmatpush2.msra.mxu0 %v586
        %765 = vmatprep.subr.mxu0 %v583
        %766 = vmatpush2.msra.mxu0 %v582
        %767 = vmatprep.subr.mxu0 %v579
        %768 = vmatpush2.msra.mxu0 %v578
        %769 = vmatprep.subr.mxu0 %v575
        %770 = vmatpush2.msra.mxu0 %v574
        %771 = vmatprep.subr.mxu0 %v571
        %772 = vmatpush2.msra.mxu0 %v570
        %773 = vmatprep.subr.mxu0 %v567
        %774 = vmatpush2.msra.mxu0 %v566
        %775 = vmatprep.subr.mxu0 %v563
        %776 = vmatpush2.msra.mxu0 %v562
        %777 = vmatprep.subr.mxu0 %v559
        %778 = vmatpush2.msra.mxu0 %v558
        %779 = vmatprep.mubr.f32.mxu0 %v365
        %780 = vmatmul.mubr.f32.gmra.mxu0 %v364
        %v781 = vpop.f32.mrf.mxu0
        %v782 = vadd.f32 %v711, %v781
        %v783 = vpop.f32.mrf.mxu0
        %v784 = vadd.f32 %v713, %v783
        %785 = vdwg.mxu0
        %786 = vmatprep.subr.mxu0 %v429
        %787 = vmatpush1.msra.mxu0 %v428
        %788 = vmatprep.subr.mxu0 %v425
        %789 = vmatpush1.msra.mxu0 %v424
        %790 = vmatprep.subr.mxu0 %v421
        %791 = vmatpush1.msra.mxu0 %v420
        %792 = vmatprep.subr.mxu0 %v417
        %793 = vmatpush1.msra.mxu0 %v416
        %794 = vmatprep.subr.mxu0 %v413
        %795 = vmatpush1.msra.mxu0 %v412
        %796 = vmatprep.subr.mxu0 %v409
        %797 = vmatpush1.msra.mxu0 %v408
        %798 = vmatprep.subr.mxu0 %v405
        %799 = vmatpush1.msra.mxu0 %v404
        %800 = vmatprep.subr.mxu0 %v401
        %801 = vmatpush1.msra.mxu0 %v400
        %802 = vmatprep.subr.mxu0 %v397
        %803 = vmatpush1.msra.mxu0 %v396
        %804 = vmatprep.subr.mxu0 %v393
        %805 = vmatpush1.msra.mxu0 %v392
        %806 = vmatprep.subr.mxu0 %v389
        %807 = vmatpush1.msra.mxu0 %v388
        %808 = vmatprep.subr.mxu0 %v385
        %809 = vmatpush1.msra.mxu0 %v384
        %810 = vmatprep.subr.mxu0 %v381
        %811 = vmatpush1.msra.mxu0 %v380
        %812 = vmatprep.subr.mxu0 %v377
        %813 = vmatpush1.msra.mxu0 %v376
        %814 = vmatprep.subr.mxu0 %v373
        %815 = vmatpush1.msra.mxu0 %v372
        %816 = vmatprep.subr.mxu0 %v369
        %817 = vmatpush1.msra.mxu0 %v368
        %818 = vmatprep.subr.mxu0 %v493
        %819 = vmatpush2.msra.mxu0 %v492
        %820 = vmatprep.subr.mxu0 %v489
        %821 = vmatpush2.msra.mxu0 %v488
        %822 = vmatprep.subr.mxu0 %v485
        %823 = vmatpush2.msra.mxu0 %v484
        %824 = vmatprep.subr.mxu0 %v481
        %825 = vmatpush2.msra.mxu0 %v480
        %826 = vmatprep.subr.mxu0 %v477
        %827 = vmatpush2.msra.mxu0 %v476
        %828 = vmatprep.subr.mxu0 %v473
        %829 = vmatpush2.msra.mxu0 %v472
        %830 = vmatprep.subr.mxu0 %v469
        %831 = vmatpush2.msra.mxu0 %v468
        %832 = vmatprep.subr.mxu0 %v465
        %833 = vmatpush2.msra.mxu0 %v464
        %834 = vmatprep.subr.mxu0 %v461
        %835 = vmatpush2.msra.mxu0 %v460
        %836 = vmatprep.subr.mxu0 %v457
        %837 = vmatpush2.msra.mxu0 %v456
        %838 = vmatprep.subr.mxu0 %v453
        %839 = vmatpush2.msra.mxu0 %v452
        %840 = vmatprep.subr.mxu0 %v449
        %841 = vmatpush2.msra.mxu0 %v448
        %842 = vmatprep.subr.mxu0 %v445
        %843 = vmatpush2.msra.mxu0 %v444
        %844 = vmatprep.subr.mxu0 %v441
        %845 = vmatpush2.msra.mxu0 %v440
        %846 = vmatprep.subr.mxu0 %v437
        %847 = vmatpush2.msra.mxu0 %v436
        %848 = vmatprep.subr.mxu0 %v433
        %849 = vmatpush2.msra.mxu0 %v432
        %850 = vmatprep.mubr.f32.mxu0 %v363
        %851 = vmatmul.mubr.f32.gmra.mxu0 %v362
        %v852 = vpop.f32.mrf.mxu0
        %v853 = vadd.f32 %v635, %v852
        %v854 = vpop.f32.mrf.mxu0
        %v855 = vadd.f32 %v639, %v854
        %856 = vdwg.mxu0
        %857 = vmatprep.subr.mxu0 %v557
        %858 = vmatpush1.msra.mxu0 %v556
        %859 = vmatprep.subr.mxu0 %v553
        %860 = vmatpush1.msra.mxu0 %v552
        %861 = vmatprep.subr.mxu0 %v549
        %862 = vmatpush1.msra.mxu0 %v548
        %863 = vmatprep.subr.mxu0 %v545
        %864 = vmatpush1.msra.mxu0 %v544
        %865 = vmatprep.subr.mxu0 %v541
        %866 = vmatpush1.msra.mxu0 %v540
        %867 = vmatprep.subr.mxu0 %v537
        %868 = vmatpush1.msra.mxu0 %v536
        %869 = vmatprep.subr.mxu0 %v533
        %870 = vmatpush1.msra.mxu0 %v532
        %871 = vmatprep.subr.mxu0 %v529
        %872 = vmatpush1.msra.mxu0 %v528
        %873 = vmatprep.subr.mxu0 %v525
        %874 = vmatpush1.msra.mxu0 %v524
        %875 = vmatprep.subr.mxu0 %v521
        %876 = vmatpush1.msra.mxu0 %v520
        %877 = vmatprep.subr.mxu0 %v517
        %878 = vmatpush1.msra.mxu0 %v516
        %879 = vmatprep.subr.mxu0 %v513
        %880 = vmatpush1.msra.mxu0 %v512
        %881 = vmatprep.subr.mxu0 %v509
        %882 = vmatpush1.msra.mxu0 %v508
        %883 = vmatprep.subr.mxu0 %v505
        %884 = vmatpush1.msra.mxu0 %v504
        %885 = vmatprep.subr.mxu0 %v501
        %886 = vmatpush1.msra.mxu0 %v500
        %887 = vmatprep.subr.mxu0 %v497
        %888 = vmatpush1.msra.mxu0 %v496
        %889 = vmatprep.subr.mxu0 %v621
        %890 = vmatpush2.msra.mxu0 %v620
        %891 = vmatprep.subr.mxu0 %v617
        %892 = vmatpush2.msra.mxu0 %v616
        %893 = vmatprep.subr.mxu0 %v613
        %894 = vmatpush2.msra.mxu0 %v612
        %895 = vmatprep.subr.mxu0 %v609
        %896 = vmatpush2.msra.mxu0 %v608
        %897 = vmatprep.subr.mxu0 %v605
        %898 = vmatpush2.msra.mxu0 %v604
        %899 = vmatprep.subr.mxu0 %v601
        %900 = vmatpush2.msra.mxu0 %v600
        %901 = vmatprep.subr.mxu0 %v597
        %902 = vmatpush2.msra.mxu0 %v596
        %903 = vmatprep.subr.mxu0 %v593
        %904 = vmatpush2.msra.mxu0 %v592
        %905 = vmatprep.subr.mxu0 %v589
        %906 = vmatpush2.msra.mxu0 %v588
        %907 = vmatprep.subr.mxu0 %v585
        %908 = vmatpush2.msra.mxu0 %v584
        %909 = vmatprep.subr.mxu0 %v581
        %910 = vmatpush2.msra.mxu0 %v580
        %911 = vmatprep.subr.mxu0 %v577
        %912 = vmatpush2.msra.mxu0 %v576
        %913 = vmatprep.subr.mxu0 %v573
        %914 = vmatpush2.msra.mxu0 %v572
        %915 = vmatprep.subr.mxu0 %v569
        %916 = vmatpush2.msra.mxu0 %v568
        %917 = vmatprep.subr.mxu0 %v565
        %918 = vmatpush2.msra.mxu0 %v564
        %919 = vmatprep.subr.mxu0 %v561
        %920 = vmatpush2.msra.mxu0 %v560
        %921 = vmatprep.mubr.f32.mxu0 %v365
        %922 = vmatmul.mubr.f32.gmra.mxu0 %v364
        %v923 = vpop.f32.mrf.mxu0
        %v924 = vadd.f32 %v853, %v923
        %v925 = vpop.f32.mrf.mxu0
        %v926 = vadd.f32 %v855, %v925
        %927 = vdwg.mxu0
        %v928 = vtanh.pop %v782
        %v929 = vtanh.pop %v784
        %v930 = vtanh.pop %v924
        %v931 = vtanh.pop %v926
        %v932 = vld [vmem:[#allocation4] sm:$0xff]
        %v933 = vld [vmem:[#allocation4 + $0x8] sm:$0xff]
        %v934 = vld [vmem:[#allocation4 + $0x10] sm:$0xff]
        %v935 = vld [vmem:[#allocation4 + $0x18] sm:$0xff]
        %v936 = vld [vmem:[#allocation4 + $0x20] sm:$0xff]
        %v937 = vld [vmem:[#allocation4 + $0x28] sm:$0xff]
        %v938 = vld [vmem:[#allocation4 + $0x30] sm:$0xff]
        %v939 = vld [vmem:[#allocation4 + $0x38] sm:$0xff]
        %v940 = vld [vmem:[#allocation4 + $0x40] sm:$0xff]
        %v941 = vld [vmem:[#allocation4 + $0x48] sm:$0xff]
        %v942 = vld [vmem:[#allocation4 + $0x50] sm:$0xff]
        %v943 = vld [vmem:[#allocation4 + $0x58] sm:$0xff]
        %v944 = vld [vmem:[#allocation4 + $0x60] sm:$0xff]
        %v945 = vld [vmem:[#allocation4 + $0x68] sm:$0xff]
        %v946 = vld [vmem:[#allocation4 + $0x70] sm:$0xff]
        %v947 = vld [vmem:[#allocation4 + $0x78] sm:$0xff]
        %v948 = vld [vmem:[#allocation4 + $0x80] sm:$0xff]
        %v949 = vld [vmem:[#allocation4 + $0x88] sm:$0xff]
        %v950 = vld [vmem:[#allocation4 + $0x90] sm:$0xff]
        %v951 = vld [vmem:[#allocation4 + $0x98] sm:$0xff]
        %v952 = vld [vmem:[#allocation4 + $0xa0] sm:$0xff]
        %v953 = vld [vmem:[#allocation4 + $0xa8] sm:$0xff]
        %v954 = vld [vmem:[#allocation4 + $0xb0] sm:$0xff]
        %v955 = vld [vmem:[#allocation4 + $0xb8] sm:$0xff]
        %v956 = vld [vmem:[#allocation4 + $0xc0] sm:$0xff]
        %v957 = vld [vmem:[#allocation4 + $0xc8] sm:$0xff]
        %v958 = vld [vmem:[#allocation4 + $0xd0] sm:$0xff]
        %v959 = vld [vmem:[#allocation4 + $0xd8] sm:$0xff]
        %v960 = vld [vmem:[#allocation4 + $0xe0] sm:$0xff]
        %v961 = vld [vmem:[#allocation4 + $0xe8] sm:$0xff]
        %v962 = vld [vmem:[#allocation4 + $0xf0] sm:$0xff]
        %v963 = vld [vmem:[#allocation4 + $0xf8] sm:$0xff]
        %v964 = vld [vmem:[#allocation4 + $0x100] sm:$0xff]
        %v965 = vld [vmem:[#allocation4 + $0x108] sm:$0xff]
        %v966 = vld [vmem:[#allocation4 + $0x110] sm:$0xff]
        %v967 = vld [vmem:[#allocation4 + $0x118] sm:$0xff]
        %v968 = vld [vmem:[#allocation4 + $0x120] sm:$0xff]
        %v969 = vld [vmem:[#allocation4 + $0x128] sm:$0xff]
        %v970 = vld [vmem:[#allocation4 + $0x130] sm:$0xff]
        %v971 = vld [vmem:[#allocation4 + $0x138] sm:$0xff]
        %v972 = vld [vmem:[#allocation4 + $0x140] sm:$0xff]
        %v973 = vld [vmem:[#allocation4 + $0x148] sm:$0xff]
        %v974 = vld [vmem:[#allocation4 + $0x150] sm:$0xff]
        %v975 = vld [vmem:[#allocation4 + $0x158] sm:$0xff]
        %v976 = vld [vmem:[#allocation4 + $0x160] sm:$0xff]
        %v977 = vld [vmem:[#allocation4 + $0x168] sm:$0xff]
        %v978 = vld [vmem:[#allocation4 + $0x170] sm:$0xff]
        %v979 = vld [vmem:[#allocation4 + $0x178] sm:$0xff]
        %v980 = vld [vmem:[#allocation4 + $0x180] sm:$0xff]
        %v981 = vld [vmem:[#allocation4 + $0x188] sm:$0xff]
        %v982 = vld [vmem:[#allocation4 + $0x190] sm:$0xff]
        %v983 = vld [vmem:[#allocation4 + $0x198] sm:$0xff]
        %v984 = vld [vmem:[#allocation4 + $0x1a0] sm:$0xff]
        %v985 = vld [vmem:[#allocation4 + $0x1a8] sm:$0xff]
        %v986 = vld [vmem:[#allocation4 + $0x1b0] sm:$0xff]
        %v987 = vld [vmem:[#allocation4 + $0x1b8] sm:$0xff]
        %v988 = vld [vmem:[#allocation4 + $0x1c0] sm:$0xff]
        %v989 = vld [vmem:[#allocation4 + $0x1c8] sm:$0xff]
        %v990 = vld [vmem:[#allocation4 + $0x1d0] sm:$0xff]
        %v991 = vld [vmem:[#allocation4 + $0x1d8] sm:$0xff]
        %v992 = vld [vmem:[#allocation4 + $0x1e0] sm:$0xff]
        %v993 = vld [vmem:[#allocation4 + $0x1e8] sm:$0xff]
        %v994 = vld [vmem:[#allocation4 + $0x1f0] sm:$0xff]
        %v995 = vld [vmem:[#allocation4 + $0x1f8] sm:$0xff]
        %v996 = vld [vmem:[%s6] sm:$0x1]
        %v998 = vlaneseq
        %v999 = vshrl.u32 %v998, 7
        %v1000 = vsub.s32 0, %v999
        %v1001 = vrot.slane %v996, %v1000
        %1003 = vmatprep.subr.mxu0 0.0
        %1004 = vmatpush1.msra.mxu0 %v947
        %1005 = vmatprep.subr.mxu0 0.0
        %1006 = vmatpush1.msra.mxu0 %v946
        %1007 = vmatprep.subr.mxu0 0.0
        %1008 = vmatpush1.msra.mxu0 %v945
        %1009 = vmatprep.subr.mxu0 0.0
        %1010 = vmatpush1.msra.mxu0 %v944
        %1011 = vmatprep.subr.mxu0 0.0
        %1012 = vmatpush1.msra.mxu0 %v943
        %1013 = vmatprep.subr.mxu0 0.0
        %1014 = vmatpush1.msra.mxu0 %v942
        %1015 = vmatprep.subr.mxu0 0.0
        %1016 = vmatpush1.msra.mxu0 %v941
        %1017 = vmatprep.subr.mxu0 0.0
        %1018 = vmatpush1.msra.mxu0 %v940
        %1019 = vmatprep.subr.mxu0 0.0
        %1020 = vmatpush1.msra.mxu0 %v939
        %1021 = vmatprep.subr.mxu0 0.0
        %1022 = vmatpush1.msra.mxu0 %v938
        %1023 = vmatprep.subr.mxu0 0.0
        %1024 = vmatpush1.msra.mxu0 %v937
        %1025 = vmatprep.subr.mxu0 0.0
        %1026 = vmatpush1.msra.mxu0 %v936
        %1027 = vmatprep.subr.mxu0 0.0
        %1028 = vmatpush1.msra.mxu0 %v935
        %1029 = vmatprep.subr.mxu0 0.0
        %1030 = vmatpush1.msra.mxu0 %v934
        %1031 = vmatprep.subr.mxu0 0.0
        %1032 = vmatpush1.msra.mxu0 %v933
        %1033 = vmatprep.subr.mxu0 0.0
        %1034 = vmatpush1.msra.mxu0 %v932
        %1035 = vmatprep.subr.mxu0 0.0
        %1036 = vmatpush2.msra.mxu0 %v963
        %1037 = vmatprep.subr.mxu0 0.0
        %1038 = vmatpush2.msra.mxu0 %v962
        %1039 = vmatprep.subr.mxu0 0.0
        %1040 = vmatpush2.msra.mxu0 %v961
        %1041 = vmatprep.subr.mxu0 0.0
        %1042 = vmatpush2.msra.mxu0 %v960
        %1043 = vmatprep.subr.mxu0 0.0
        %1044 = vmatpush2.msra.mxu0 %v959
        %1045 = vmatprep.subr.mxu0 0.0
        %1046 = vmatpush2.msra.mxu0 %v958
        %1047 = vmatprep.subr.mxu0 0.0
        %1048 = vmatpush2.msra.mxu0 %v957
        %1049 = vmatprep.subr.mxu0 0.0
        %1050 = vmatpush2.msra.mxu0 %v956
        %1051 = vmatprep.subr.mxu0 0.0
        %1052 = vmatpush2.msra.mxu0 %v955
        %1053 = vmatprep.subr.mxu0 0.0
        %1054 = vmatpush2.msra.mxu0 %v954
        %1055 = vmatprep.subr.mxu0 0.0
        %1056 = vmatpush2.msra.mxu0 %v953
        %1057 = vmatprep.subr.mxu0 0.0
        %1058 = vmatpush2.msra.mxu0 %v952
        %1059 = vmatprep.subr.mxu0 0.0
        %1060 = vmatpush2.msra.mxu0 %v951
        %1061 = vmatprep.subr.mxu0 0.0
        %1062 = vmatpush2.msra.mxu0 %v950
        %1063 = vmatprep.subr.mxu0 0.0
        %1064 = vmatpush2.msra.mxu0 %v949
        %1065 = vmatprep.subr.mxu0 0.0
        %1066 = vmatpush2.msra.mxu0 %v948
        %1067 = vmatprep.mubr.f32.mxu0 %v929
        %1068 = vmatmul.mubr.f32.gmra.mxu0 %v928
        %v1069 = vpop.f32.mrf.mxu0
        %v1070 = vadd.f32 %v1001, %v1069
        %v1071 = vpop.f32.mrf.mxu0
        %1072 = vdwg.mxu0
        %1073 = vmatprep.subr.mxu0 0.0
        %1074 = vmatpush1.msra.mxu0 %v979
        %1075 = vmatprep.subr.mxu0 0.0
        %1076 = vmatpush1.msra.mxu0 %v978
        %1077 = vmatprep.subr.mxu0 0.0
        %1078 = vmatpush1.msra.mxu0 %v977
        %1079 = vmatprep.subr.mxu0 0.0
        %1080 = vmatpush1.msra.mxu0 %v976
        %1081 = vmatprep.subr.mxu0 0.0
        %1082 = vmatpush1.msra.mxu0 %v975
        %1083 = vmatprep.subr.mxu0 0.0
        %1084 = vmatpush1.msra.mxu0 %v974
        %1085 = vmatprep.subr.mxu0 0.0
        %1086 = vmatpush1.msra.mxu0 %v973
        %1087 = vmatprep.subr.mxu0 0.0
        %1088 = vmatpush1.msra.mxu0 %v972
        %1089 = vmatprep.subr.mxu0 0.0
        %1090 = vmatpush1.msra.mxu0 %v971
        %1091 = vmatprep.subr.mxu0 0.0
        %1092 = vmatpush1.msra.mxu0 %v970
        %1093 = vmatprep.subr.mxu0 0.0
        %1094 = vmatpush1.msra.mxu0 %v969
        %1095 = vmatprep.subr.mxu0 0.0
        %1096 = vmatpush1.msra.mxu0 %v968
        %1097 = vmatprep.subr.mxu0 0.0
        %1098 = vmatpush1.msra.mxu0 %v967
        %1099 = vmatprep.subr.mxu0 0.0
        %1100 = vmatpush1.msra.mxu0 %v966
        %1101 = vmatprep.subr.mxu0 0.0
        %1102 = vmatpush1.msra.mxu0 %v965
        %1103 = vmatprep.subr.mxu0 0.0
        %1104 = vmatpush1.msra.mxu0 %v964
        %1105 = vmatprep.subr.mxu0 0.0
        %1106 = vmatpush2.msra.mxu0 %v995
        %1107 = vmatprep.subr.mxu0 0.0
        %1108 = vmatpush2.msra.mxu0 %v994
        %1109 = vmatprep.subr.mxu0 0.0
        %1110 = vmatpush2.msra.mxu0 %v993
        %1111 = vmatprep.subr.mxu0 0.0
        %1112 = vmatpush2.msra.mxu0 %v992
        %1113 = vmatprep.subr.mxu0 0.0
        %1114 = vmatpush2.msra.mxu0 %v991
        %1115 = vmatprep.subr.mxu0 0.0
        %1116 = vmatpush2.msra.mxu0 %v990
        %1117 = vmatprep.subr.mxu0 0.0
        %1118 = vmatpush2.msra.mxu0 %v989
        %1119 = vmatprep.subr.mxu0 0.0
        %1120 = vmatpush2.msra.mxu0 %v988
        %1121 = vmatprep.subr.mxu0 0.0
        %1122 = vmatpush2.msra.mxu0 %v987
        %1123 = vmatprep.subr.mxu0 0.0
        %1124 = vmatpush2.msra.mxu0 %v986
        %1125 = vmatprep.subr.mxu0 0.0
        %1126 = vmatpush2.msra.mxu0 %v985
        %1127 = vmatprep.subr.mxu0 0.0
        %1128 = vmatpush2.msra.mxu0 %v984
        %1129 = vmatprep.subr.mxu0 0.0
        %1130 = vmatpush2.msra.mxu0 %v983
        %1131 = vmatprep.subr.mxu0 0.0
        %1132 = vmatpush2.msra.mxu0 %v982
        %1133 = vmatprep.subr.mxu0 0.0
        %1134 = vmatpush2.msra.mxu0 %v981
        %1135 = vmatprep.subr.mxu0 0.0
        %1136 = vmatpush2.msra.mxu0 %v980
        %1137 = vmatprep.mubr.f32.mxu0 %v931
        %1138 = vmatmul.mubr.f32.gmra.mxu0 %v930
        %v1139 = vpop.f32.mrf.mxu0
        %v1140 = vadd.f32 %v1070, %v1139
        %v1141 = vpop.f32.mrf.mxu0
        %1142 = vdwg.mxu0
        %1143 = vst [vmem:[%s303] sm:$0xff] %v1140
        %p1144 = scmp.lt.s32.totalorder %s20, 3
        %s1145 = scalar_select %p1144, %s20, 3
        %s1146 = smul.addr %s1145, 8
        %s1147 = scalar_lea.vmem %s7, %s1146
        // Predicated region
        $region57: #{ode_identifier_forward_steps.1} parent=47 // pred_check
          %p1148 = pneg %p190
        $region58: #{ode_identifier_forward_steps.1} parent=47 // pred_check_branch
          %1150 = sbr.rel (%p1148) target = $region60
        $region59: #{ode_identifier_forward_steps.1} parent=47 // pred_region
          _
        $region60: #{ode_identifier_forward_steps.1} parent=47 // pred_fallthru
          _
      $region48: #{ode_identifier_forward_steps.1} parent=5 // pred_fallthru
        _
      %p1151 = scmp.le.s32.totalorder 2, %s15
      // Predicated region
      $region61: #{ode_identifier_forward_steps.1} parent=5 // pred_check
        %p1152 = pneg %p1151
      $region62: #{ode_identifier_forward_steps.1} parent=5 // pred_check_branch
        %1154 = sbr.rel (%p1152) target = $region64
      $region63: #{ode_identifier_forward_steps.1} parent=5 // pred_region
        %s1155 = ssub.s32 %s15, 2
        // Predicated region
        $region65: #{ode_identifier_forward_steps.1} parent=63 // pred_check
          %p1156 = pneg %p196
        $region66: #{ode_identifier_forward_steps.1} parent=63 // pred_check_branch
          %1158 = sbr.rel (%p1156) target = $region68
        $region67: #{ode_identifier_forward_steps.1} parent=63 // pred_region
          %p1159 = scmp.lt.s32.totalorder %s21, 3
          %s1160 = scalar_select %p1159, %s21, 3
          %s1161 = smul.addr %s1160, 8
          %s1162 = scalar_lea.vmem %s7, %s1161
        $region68: #{ode_identifier_forward_steps.1} parent=63 // pred_fallthru
          _
      $region64: #{ode_identifier_forward_steps.1} parent=5 // pred_fallthru
        _
    $region6: #{ode_identifier_forward_steps.1} parent=1 // loop_footer
      %s19 = sadd.s32 1, %s15
    $region7: #{ode_identifier_forward_steps.1} parent=1 // loop_footer_branch
      %14 = sbr.rel target = $region3
    $region8: #{ode_identifier_forward_steps.1} parent=1 // loop_exit
      _
    %1163 = vsyncpa [#allocation3], 1
    %s1164 = scalar_lea.sflag [#allocation3], 1
    %1165 = vsyncpa %s1164, 1
    %1166 = vsyncpa [#allocation5], 1

</llo_original>
